<compile_context>
chip_gen: v6e
topology: v6e:2x2x1
jax: 0.10.0
libtpu: 0.0.40
codegen_flags: <defaults>
</compile_context>

<pallas_src>
import functools
import math

import jax
import jax.numpy as jnp
from jax.experimental import pallas as pl
from jax.experimental.pallas import tpu as pltpu

EPS = 1e-8


# --------------------------------------------------------------------------
# Fused kernel: triplet + expander(anchor,positive) + VICReg -> 3 scalars
# --------------------------------------------------------------------------
def _encoder_loss_kernel(a_ref, p_ref, n_ref, b1_ref, b2_ref, w1_hbm, w2_hbm,
                         out_ref, w1_vmem, w2_vmem, dma_sem, *,
                         margin, gamma, var_coeff, inv_coeff, cov_coeff,
                         triplet_weight, vicreg_weight, use_bf16_matmul):
    # -- kick off expander-weight DMA (HBM -> VMEM); overlapped with triplet --
    cp_w1 = pltpu.make_async_copy(w1_hbm, w1_vmem, dma_sem.at[0])
    cp_w2 = pltpu.make_async_copy(w2_hbm, w2_vmem, dma_sem.at[1])
    cp_w1.start()
    cp_w2.start()

    a = a_ref[...].astype(jnp.float32)                        # (B, D)
    p = p_ref[...].astype(jnp.float32)                        # (B, D)
    n = n_ref[...].astype(jnp.float32)                        # (B, D)
    b = a.shape[0]

    inv_b = 1.0 / b
    mm_dtype = jnp.bfloat16 if use_bf16_matmul else jnp.float32

    # ---- one combined row-normalization pass over [a; p; n]  (3B, D) --------
    apn = jnp.concatenate([a, p, n], axis=0)                  # (3B, D)
    row_ss = jnp.sum(apn * apn, axis=1, keepdims=True)        # (3B, 1)
    # z / max(||z||, EPS) == z * rsqrt(max(||z||^2, EPS^2))  (rsqrt -> EUP)
    apn_hat = apn * jax.lax.rsqrt(jnp.maximum(row_ss, EPS * EPS))
    a_hat = apn_hat[:b]
    p_hat = apn_hat[b:2 * b]
    n_hat = apn_hat[2 * b:]

    # ---- triplet margin loss (cosine distances, hardest negative) -----------
    d_ap = 1.0 - jnp.sum(a_hat * p_hat, axis=1, keepdims=True)          # (B,1)
    d_an = 1.0 - jax.lax.dot_general(                                    # (B,B)
        a_hat.astype(mm_dtype), n_hat.astype(mm_dtype),
        (((1,), (1,)), ((), ())), preferred_element_type=jnp.float32)
    # temperature == 0: hardest (closest) negative per anchor
    d_an_min = jnp.min(d_an, axis=1, keepdims=True)                      # (B,1)
    hinge = jnp.maximum(d_ap - d_an_min + margin, 0.0)
    t_loss = jnp.sum(hinge, keepdims=True) * inv_b                       # (1,1)

    # ---- expander on stacked (anchor, positive): weights pushed once --------
    cp_w1.wait()
    cp_w2.wait()
    ap = apn[:2 * b]                                                     # (2B,D)
    hid = jnp.dot(ap.astype(mm_dtype), w1_vmem[...],
                  preferred_element_type=jnp.float32)
    hid = jnp.maximum(hid + b1_ref[...].astype(jnp.float32), 0.0)
    emb = jnp.dot(hid.astype(mm_dtype), w2_vmem[...],
                  preferred_element_type=jnp.float32)
    emb = emb + b2_ref[...].astype(jnp.float32)                          # (2B,E)
    e = emb.shape[1]
    ex = emb[:b]                                                         # (B, E)
    ey = emb[b:]

    inv_e = 1.0 / e
    inv_sqrt_bm1 = 1.0 / math.sqrt(b - 1)
    inv_bm1sq_e = 1.0 / (float(b - 1) ** 2 * e)

    # ---- VICReg --------------------------------------------------------------
    # center each branch; column sum-of-squares reused for std and diag(cov)
    zc_x = ex - jnp.sum(ex, axis=0, keepdims=True) * inv_b
    zc_y = ey - jnp.sum(ey, axis=0, keepdims=True) * inv_b
    ss_x = jnp.sum(zc_x * zc_x, axis=0, keepdims=True)                   # (1,E)
    ss_y = jnp.sum(zc_y * zc_y, axis=0, keepdims=True)                   # (1,E)

    # variance term: torch.std (unbiased); constant divisors folded into scalars
    std_x = jnp.sqrt(ss_x) * inv_sqrt_bm1
    std_y = jnp.sqrt(ss_y) * inv_sqrt_bm1
    var_x = jnp.sum(jnp.maximum(gamma - std_x, 0.0), keepdims=True) * inv_e
    var_y = jnp.sum(jnp.maximum(gamma - std_y, 0.0), keepdims=True) * inv_e

    # covariance term: ONE stacked (2B,2B) Gram matmul for both branches.
    #   sum(cov^2) = ||Zc Zc^T||_F^2 / (b-1)^2 ; sum(diag(cov)^2) = sum(ss^2)/(b-1)^2
    zc = jnp.concatenate([zc_x, zc_y], axis=0)                           # (2B,E)
    gram = jax.lax.dot_general(zc, zc, (((1,), (1,)), ((), ())),
                               preferred_element_type=jnp.float32)       # (2B,2B)
    g2 = gram * gram
    row = jax.lax.broadcasted_iota(jnp.int32, (2 * b, 2 * b), 0)
    col = jax.lax.broadcasted_iota(jnp.int32, (2 * b, 2 * b), 1)
    in_x = jnp.logical_and(row < b, col < b)
    in_y = jnp.logical_and(row >= b, col >= b)
    sum_gxx = jnp.sum(jnp.where(in_x, g2, 0.0), keepdims=True)
    sum_gyy = jnp.sum(jnp.where(in_y, g2, 0.0), keepdims=True)
    # NOTE: f32 cancellation possible if off-diagonal covariance energy is tiny
    # relative to the diagonal; acceptable for a cov_coeff~1e-5 regularizer.
    cov_x = (sum_gxx - jnp.sum(ss_x * ss_x, keepdims=True)) * inv_bm1sq_e
    cov_y = (sum_gyy - jnp.sum(ss_y * ss_y, keepdims=True)) * inv_bm1sq_e

    # invariance: F.mse_loss on the raw expanded embeddings
    diff = ex - ey
    inv_loss = jnp.sum(diff * diff, keepdims=True) * (inv_b * inv_e)     # (1,1)

    v_loss = (var_coeff * 0.5 * (var_x + var_y)
              + inv_coeff * inv_loss
              + cov_coeff * 0.5 * (cov_x + cov_y))                       # (1,1)

    overall = triplet_weight * t_loss + vicreg_weight * v_loss           # (1,1)

    # ---- single lane-dense output: [overall, triplet, vicreg, 0, ...] -------
    lane = jax.lax.broadcasted_iota(jnp.int32, (1, 128), 1)
    out_ref[...] = (jnp.where(lane == 0, overall, 0.0)
                    + jnp.where(lane == 1, t_loss, 0.0)
                    + jnp.where(lane == 2, v_loss, 0.0))


# --------------------------------------------------------------------------
# Wrapper
# --------------------------------------------------------------------------
def encoder_loss(anchor, positive, negative, expander_params, *,
                 triplet_weight=1.0, vicreg_weight=1.0,
                 var_coeff=1.0, inv_coeff=1.0, cov_coeff=1e-5,
                 margin=1.0, gamma=1.0, use_bf16_matmul=False):
    w1, b1, w2, b2 = expander_params
    b, d = anchor.shape
    h = w1.shape[1]
    e = w2.shape[1]
    if b < 2:
        raise ValueError("EncoderLoss needs batch >= 2 (unbiased std / covariance).")

    w_dtype = jnp.bfloat16 if use_bf16_matmul else jnp.float32
    w1 = w1.astype(w_dtype)
    w2 = w2.astype(w_dtype)
    b1 = b1.reshape(1, h).astype(jnp.float32)
    b2 = b2.reshape(1, e).astype(jnp.float32)

    # advisory cost hint for XLA scheduling around the fused custom call
    flops = int(2 * b * b * d                         # pairwise cosine matmul
                + 2 * (2 * b) * (d * h + h * e)       # expander on (2B, D)
                + 2 * (2 * b) * (2 * b) * e)          # stacked (2B,2B) Gram
    transcendentals = int(3 * b + 2 * e)              # rsqrt row norms + std sqrt
    w_itemsize = 2 if use_bf16_matmul else 4
    bytes_accessed = int(4 * (3 * b * d + h + e + 128)
                         + w_itemsize * (d * h + h * e))

    # VMEM budget from actual residency (weights + activations), with headroom;
    # kept under the v7x 64 MiB physical ceiling only for realistic sizes --
    # larger expander dims should move to a tiled/gridded variant.
    resident = (w_itemsize * (d * h + h * e)
                + 4 * (3 * b * d + h + e + 128)
                + 4 * (6 * b * d + 2 * b * h + 4 * b * e + 5 * b * b))
    vmem_limit = int(min(max(4 * resident, 16 * 1024 * 1024), 96 * 1024 * 1024))

    vmem = pl.BlockSpec(memory_space=pltpu.MemorySpace.VMEM)
    hbm = pl.BlockSpec(memory_space=pl.ANY)

    out = pl.pallas_call(
        functools.partial(_encoder_loss_kernel, margin=float(margin),
                          gamma=float(gamma), var_coeff=float(var_coeff),
                          inv_coeff=float(inv_coeff), cov_coeff=float(cov_coeff),
                          triplet_weight=float(triplet_weight),
                          vicreg_weight=float(vicreg_weight),
                          use_bf16_matmul=use_bf16_matmul),
        out_shape=jax.ShapeDtypeStruct((1, 128), jnp.float32),
        in_specs=[vmem, vmem, vmem, vmem, vmem, hbm, hbm],
        out_specs=vmem,
        scratch_shapes=[pltpu.VMEM((d, h), w_dtype),
                        pltpu.VMEM((h, e), w_dtype),
                        pltpu.SemaphoreType.DMA((2,))],
        compiler_params=pltpu.CompilerParams(vmem_limit_bytes=vmem_limit),
        cost_estimate=pl.CostEstimate(flops=flops,
                                      transcendentals=transcendentals,
                                      bytes_accessed=bytes_accessed),
    )(anchor, positive, negative, b1, b2, w1, w2)

    return {'Overall Loss': out[0, 0],
            'Triplet Loss': out[0, 1],
            'VICReg Loss': out[0, 2]}


if __name__ == "__main__":
    B, D, H, E = 8, 32, 64, 64

    key = jax.random.PRNGKey(0)
    k_a, k_p, k_n, k_w1, k_w2 = jax.random.split(key, 5)

    anchor = jax.random.normal(k_a, (B, D), dtype=jnp.float32)
    positive = anchor + 0.1 * jax.random.normal(k_p, (B, D), dtype=jnp.float32)
    negative = jax.random.normal(k_n, (B, D), dtype=jnp.float32)

    # deterministic expander params (Linear(D,H) -> ReLU -> Linear(H,E))
    w1 = (1.0 / jnp.sqrt(D)) * jax.random.normal(k_w1, (D, H), dtype=jnp.float32)
    b1 = jnp.zeros((1, H), dtype=jnp.float32)
    w2 = (1.0 / jnp.sqrt(H)) * jax.random.normal(k_w2, (H, E), dtype=jnp.float32)
    b2 = jnp.zeros((1, E), dtype=jnp.float32)
    params = (w1, b1, w2, b2)

    losses = encoder_loss(anchor, positive, negative, params,
                          triplet_weight=1.0, vicreg_weight=1.0,
                          var_coeff=1.0, inv_coeff=1.0, cov_coeff=1e-5,
                          margin=1.0, gamma=1.0)
    jax.block_until_ready(losses)
    print("KERNEL_OK")
</pallas_src>

<mosaic_0001>
module attributes {stable_mosaic.version = 11 : i64} {
  func.func @_encoder_loss_kernel(%arg0: memref<8x32xf32, #tpu.memory_space<vmem>>, %arg1: memref<8x32xf32, #tpu.memory_space<vmem>>, %arg2: memref<8x32xf32, #tpu.memory_space<vmem>>, %arg3: memref<1x64xf32, #tpu.memory_space<vmem>>, %arg4: memref<1x64xf32, #tpu.memory_space<vmem>>, %arg5: memref<32x64xf32, #tpu.memory_space<any>>, %arg6: memref<64x64xf32, #tpu.memory_space<any>>, %arg7: memref<1x128xf32, #tpu.memory_space<vmem>>, %arg8: memref<32x64xf32, #tpu.memory_space<vmem>>, %arg9: memref<64x64xf32, #tpu.memory_space<vmem>>, %arg10: memref<2x!tpu.dma_semaphore, #tpu.memory_space<semaphore_mem>>) attributes {dimension_semantics = [], scalar_prefetch = 0 : i64, scratch_operands = 3 : i64, tpu.core_type = #tpu.core_type<tc>} {
    %c0_i32 = arith.constant 0 : i32
    %0 = tpu.memref_slice %arg10[%c0_i32] : memref<2x!tpu.dma_semaphore, #tpu.memory_space<semaphore_mem>> -> memref<1x!tpu.dma_semaphore, #tpu.memory_space<semaphore_mem>>
    %1 = tpu.memref_squeeze %0 : memref<1x!tpu.dma_semaphore, #tpu.memory_space<semaphore_mem>> -> memref<!tpu.dma_semaphore, #tpu.memory_space<semaphore_mem>>
    tpu.enqueue_dma source(%arg5 : memref<32x64xf32, #tpu.memory_space<any>>) target(%arg8 : memref<32x64xf32, #tpu.memory_space<vmem>>) target_semaphore(%1 : memref<!tpu.dma_semaphore, #tpu.memory_space<semaphore_mem>>)
    %c1_i32 = arith.constant 1 : i32
    %2 = tpu.memref_slice %arg10[%c1_i32] : memref<2x!tpu.dma_semaphore, #tpu.memory_space<semaphore_mem>> -> memref<1x!tpu.dma_semaphore, #tpu.memory_space<semaphore_mem>>
    %3 = tpu.memref_squeeze %2 : memref<1x!tpu.dma_semaphore, #tpu.memory_space<semaphore_mem>> -> memref<!tpu.dma_semaphore, #tpu.memory_space<semaphore_mem>>
    tpu.enqueue_dma source(%arg6 : memref<64x64xf32, #tpu.memory_space<any>>) target(%arg9 : memref<64x64xf32, #tpu.memory_space<vmem>>) target_semaphore(%3 : memref<!tpu.dma_semaphore, #tpu.memory_space<semaphore_mem>>)
    %c0 = arith.constant 0 : index
    %c0_0 = arith.constant 0 : index
    %4 = vector.load %arg0[%c0, %c0_0] : memref<8x32xf32, #tpu.memory_space<vmem>>, vector<8x32xf32>
    %c0_1 = arith.constant 0 : index
    %c0_2 = arith.constant 0 : index
    %5 = vector.load %arg1[%c0_1, %c0_2] : memref<8x32xf32, #tpu.memory_space<vmem>>, vector<8x32xf32>
    %c0_3 = arith.constant 0 : index
    %c0_4 = arith.constant 0 : index
    %6 = vector.load %arg2[%c0_3, %c0_4] : memref<8x32xf32, #tpu.memory_space<vmem>>, vector<8x32xf32>
    %7 = tpu.concatenate %4, %5, %6 in 0 : vector<8x32xf32>, vector<8x32xf32>, vector<8x32xf32> -> vector<24x32xf32>
    %8 = arith.mulf %7, %7 : vector<24x32xf32>
    %cst = arith.constant dense<0.000000e+00> : vector<24xf32>
    %9 = vector.multi_reduction <add>, %8, %cst [1] : vector<24x32xf32> to vector<24xf32>
    %10 = vector.shape_cast %9 : vector<24xf32> to vector<24x1xf32>
    %cst_5 = arith.constant 1.000000e-16 : f32
    %11 = vector.broadcast %cst_5 : f32 to vector<24x1xf32>
    %12 = arith.maximumf %10, %11 : vector<24x1xf32>
    %13 = math.rsqrt %12 : vector<24x1xf32>
    %14 = vector.broadcast %13 : vector<24x1xf32> to vector<24x32xf32>
    %15 = arith.mulf %7, %14 : vector<24x32xf32>
    %16 = vector.extract_strided_slice %15 {offsets = [0, 0], sizes = [8, 32], strides = [1, 1]} : vector<24x32xf32> to vector<8x32xf32>
    %17 = vector.extract_strided_slice %15 {offsets = [8, 0], sizes = [8, 32], strides = [1, 1]} : vector<24x32xf32> to vector<8x32xf32>
    %18 = vector.extract_strided_slice %15 {offsets = [16, 0], sizes = [8, 32], strides = [1, 1]} : vector<24x32xf32> to vector<8x32xf32>
    %19 = arith.mulf %16, %17 : vector<8x32xf32>
    %cst_6 = arith.constant dense<0.000000e+00> : vector<8xf32>
    %20 = vector.multi_reduction <add>, %19, %cst_6 [1] : vector<8x32xf32> to vector<8xf32>
    %21 = vector.shape_cast %20 : vector<8xf32> to vector<8x1xf32>
    %cst_7 = arith.constant 1.000000e+00 : f32
    %22 = vector.broadcast %cst_7 : f32 to vector<8x1xf32>
    %23 = arith.subf %22, %21 : vector<8x1xf32>
    %cst_8 = arith.constant dense<0.000000e+00> : vector<8x8xf32>
    %24 = tpu.matmul %16, %18, %cst_8 {dimension_numbers = #tpu.dot_dimension_numbers<[1], [1], [0], [0], [0, 0, 1, 0], [], []>} : vector<8x32xf32>, vector<8x32xf32>, vector<8x8xf32> -> vector<8x8xf32>
    %cst_9 = arith.constant 1.000000e+00 : f32
    %25 = vector.broadcast %cst_9 : f32 to vector<8x8xf32>
    %26 = arith.subf %25, %24 : vector<8x8xf32>
    %cst_10 = arith.constant dense<0x7F800000> : vector<8xf32>
    %27 = vector.multi_reduction <minimumf>, %26, %cst_10 [1] : vector<8x8xf32> to vector<8xf32>
    %28 = vector.shape_cast %27 : vector<8xf32> to vector<8x1xf32>
    %29 = arith.subf %23, %28 : vector<8x1xf32>
    %cst_11 = arith.constant 1.000000e+00 : f32
    %30 = vector.broadcast %cst_11 : f32 to vector<8x1xf32>
    %31 = arith.addf %29, %30 : vector<8x1xf32>
    %cst_12 = arith.constant 0.000000e+00 : f32
    %32 = vector.broadcast %cst_12 : f32 to vector<8x1xf32>
    %33 = arith.maximumf %31, %32 : vector<8x1xf32>
    %34 = vector.shape_cast %33 : vector<8x1xf32> to vector<1x8x1xf32>
    %cst_13 = arith.constant dense<0.000000e+00> : vector<1xf32>
    %35 = vector.multi_reduction <add>, %34, %cst_13 [1, 2] : vector<1x8x1xf32> to vector<1xf32>
    %36 = vector.shape_cast %35 : vector<1xf32> to vector<1x1x1xf32>
    %37 = vector.extract %36[0, 0, 0] : f32 from vector<1x1x1xf32>
    %38 = vector.broadcast %37 : f32 to vector<1x1xf32>
    %cst_14 = arith.constant 1.250000e-01 : f32
    %39 = vector.broadcast %cst_14 : f32 to vector<1x1xf32>
    %40 = arith.mulf %38, %39 : vector<1x1xf32>
    %c0_i32_15 = arith.constant 0 : i32
    %41 = tpu.memref_slice %arg10[%c0_i32_15] : memref<2x!tpu.dma_semaphore, #tpu.memory_space<semaphore_mem>> -> memref<1x!tpu.dma_semaphore, #tpu.memory_space<semaphore_mem>>
    %42 = tpu.memref_squeeze %41 : memref<1x!tpu.dma_semaphore, #tpu.memory_space<semaphore_mem>> -> memref<!tpu.dma_semaphore, #tpu.memory_space<semaphore_mem>>
    tpu.wait_dma2 semaphore(%42 : memref<!tpu.dma_semaphore, #tpu.memory_space<semaphore_mem>>) src(%arg5 : memref<32x64xf32, #tpu.memory_space<any>>) dst(%arg8 : memref<32x64xf32, #tpu.memory_space<vmem>>)
    %c1_i32_16 = arith.constant 1 : i32
    %43 = tpu.memref_slice %arg10[%c1_i32_16] : memref<2x!tpu.dma_semaphore, #tpu.memory_space<semaphore_mem>> -> memref<1x!tpu.dma_semaphore, #tpu.memory_space<semaphore_mem>>
    %44 = tpu.memref_squeeze %43 : memref<1x!tpu.dma_semaphore, #tpu.memory_space<semaphore_mem>> -> memref<!tpu.dma_semaphore, #tpu.memory_space<semaphore_mem>>
    tpu.wait_dma2 semaphore(%44 : memref<!tpu.dma_semaphore, #tpu.memory_space<semaphore_mem>>) src(%arg6 : memref<64x64xf32, #tpu.memory_space<any>>) dst(%arg9 : memref<64x64xf32, #tpu.memory_space<vmem>>)
    %45 = vector.extract_strided_slice %7 {offsets = [0, 0], sizes = [16, 32], strides = [1, 1]} : vector<24x32xf32> to vector<16x32xf32>
    %c0_17 = arith.constant 0 : index
    %c0_18 = arith.constant 0 : index
    %46 = vector.load %arg8[%c0_17, %c0_18] : memref<32x64xf32, #tpu.memory_space<vmem>>, vector<32x64xf32>
    %cst_19 = arith.constant dense<0.000000e+00> : vector<16x64xf32>
    %47 = tpu.matmul %45, %46, %cst_19 {dimension_numbers = #tpu.dot_dimension_numbers<[1], [0], [0], [1], [0, 0, 1, 1], [], []>} : vector<16x32xf32>, vector<32x64xf32>, vector<16x64xf32> -> vector<16x64xf32>
    %c0_20 = arith.constant 0 : index
    %c0_21 = arith.constant 0 : index
    %48 = vector.load %arg3[%c0_20, %c0_21] : memref<1x64xf32, #tpu.memory_space<vmem>>, vector<1x64xf32>
    %49 = vector.broadcast %48 : vector<1x64xf32> to vector<16x64xf32>
    %50 = arith.addf %47, %49 : vector<16x64xf32>
    %cst_22 = arith.constant 0.000000e+00 : f32
    %51 = vector.broadcast %cst_22 : f32 to vector<16x64xf32>
    %52 = arith.maximumf %50, %51 : vector<16x64xf32>
    %c0_23 = arith.constant 0 : index
    %c0_24 = arith.constant 0 : index
    %53 = vector.load %arg9[%c0_23, %c0_24] : memref<64x64xf32, #tpu.memory_space<vmem>>, vector<64x64xf32>
    %cst_25 = arith.constant dense<0.000000e+00> : vector<16x64xf32>
    %54 = tpu.matmul %52, %53, %cst_25 {dimension_numbers = #tpu.dot_dimension_numbers<[1], [0], [0], [1], [0, 0, 1, 1], [], []>} : vector<16x64xf32>, vector<64x64xf32>, vector<16x64xf32> -> vector<16x64xf32>
    %c0_26 = arith.constant 0 : index
    %c0_27 = arith.constant 0 : index
    %55 = vector.load %arg4[%c0_26, %c0_27] : memref<1x64xf32, #tpu.memory_space<vmem>>, vector<1x64xf32>
    %56 = vector.broadcast %55 : vector<1x64xf32> to vector<16x64xf32>
    %57 = arith.addf %54, %56 : vector<16x64xf32>
    %58 = vector.extract_strided_slice %57 {offsets = [0, 0], sizes = [8, 64], strides = [1, 1]} : vector<16x64xf32> to vector<8x64xf32>
    %59 = vector.extract_strided_slice %57 {offsets = [8, 0], sizes = [8, 64], strides = [1, 1]} : vector<16x64xf32> to vector<8x64xf32>
    %cst_28 = arith.constant dense<0.000000e+00> : vector<64xf32>
    %60 = vector.multi_reduction <add>, %58, %cst_28 [0] : vector<8x64xf32> to vector<64xf32>
    %61 = vector.shape_cast %60 : vector<64xf32> to vector<1x64xf32>
    %cst_29 = arith.constant 1.250000e-01 : f32
    %62 = vector.broadcast %cst_29 : f32 to vector<1x64xf32>
    %63 = arith.mulf %61, %62 : vector<1x64xf32>
    %64 = vector.broadcast %63 : vector<1x64xf32> to vector<8x64xf32>
    %65 = arith.subf %58, %64 : vector<8x64xf32>
    %cst_30 = arith.constant dense<0.000000e+00> : vector<64xf32>
    %66 = vector.multi_reduction <add>, %59, %cst_30 [0] : vector<8x64xf32> to vector<64xf32>
    %67 = vector.shape_cast %66 : vector<64xf32> to vector<1x64xf32>
    %cst_31 = arith.constant 1.250000e-01 : f32
    %68 = vector.broadcast %cst_31 : f32 to vector<1x64xf32>
    %69 = arith.mulf %67, %68 : vector<1x64xf32>
    %70 = vector.broadcast %69 : vector<1x64xf32> to vector<8x64xf32>
    %71 = arith.subf %59, %70 : vector<8x64xf32>
    %72 = arith.mulf %65, %65 : vector<8x64xf32>
    %cst_32 = arith.constant dense<0.000000e+00> : vector<64xf32>
    %73 = vector.multi_reduction <add>, %72, %cst_32 [0] : vector<8x64xf32> to vector<64xf32>
    %74 = vector.shape_cast %73 : vector<64xf32> to vector<1x64xf32>
    %75 = arith.mulf %71, %71 : vector<8x64xf32>
    %cst_33 = arith.constant dense<0.000000e+00> : vector<64xf32>
    %76 = vector.multi_reduction <add>, %75, %cst_33 [0] : vector<8x64xf32> to vector<64xf32>
    %77 = vector.shape_cast %76 : vector<64xf32> to vector<1x64xf32>
    %78 = math.sqrt %74 : vector<1x64xf32>
    %cst_34 = arith.constant 0.377964467 : f32
    %79 = vector.broadcast %cst_34 : f32 to vector<1x64xf32>
    %80 = arith.mulf %78, %79 : vector<1x64xf32>
    %81 = math.sqrt %77 : vector<1x64xf32>
    %cst_35 = arith.constant 0.377964467 : f32
    %82 = vector.broadcast %cst_35 : f32 to vector<1x64xf32>
    %83 = arith.mulf %81, %82 : vector<1x64xf32>
    %cst_36 = arith.constant 1.000000e+00 : f32
    %84 = vector.broadcast %cst_36 : f32 to vector<1x64xf32>
    %85 = arith.subf %84, %80 : vector<1x64xf32>
    %cst_37 = arith.constant 0.000000e+00 : f32
    %86 = vector.broadcast %cst_37 : f32 to vector<1x64xf32>
    %87 = arith.maximumf %85, %86 : vector<1x64xf32>
    %88 = vector.shape_cast %87 : vector<1x64xf32> to vector<1x1x64xf32>
    %cst_38 = arith.constant dense<0.000000e+00> : vector<1xf32>
    %89 = vector.multi_reduction <add>, %88, %cst_38 [1, 2] : vector<1x1x64xf32> to vector<1xf32>
    %90 = vector.shape_cast %89 : vector<1xf32> to vector<1x1x1xf32>
    %91 = vector.extract %90[0, 0, 0] : f32 from vector<1x1x1xf32>
    %92 = vector.broadcast %91 : f32 to vector<1x1xf32>
    %cst_39 = arith.constant 1.562500e-02 : f32
    %93 = vector.broadcast %cst_39 : f32 to vector<1x1xf32>
    %94 = arith.mulf %92, %93 : vector<1x1xf32>
    %cst_40 = arith.constant 1.000000e+00 : f32
    %95 = vector.broadcast %cst_40 : f32 to vector<1x64xf32>
    %96 = arith.subf %95, %83 : vector<1x64xf32>
    %cst_41 = arith.constant 0.000000e+00 : f32
    %97 = vector.broadcast %cst_41 : f32 to vector<1x64xf32>
    %98 = arith.maximumf %96, %97 : vector<1x64xf32>
    %99 = vector.shape_cast %98 : vector<1x64xf32> to vector<1x1x64xf32>
    %cst_42 = arith.constant dense<0.000000e+00> : vector<1xf32>
    %100 = vector.multi_reduction <add>, %99, %cst_42 [1, 2] : vector<1x1x64xf32> to vector<1xf32>
    %101 = vector.shape_cast %100 : vector<1xf32> to vector<1x1x1xf32>
    %102 = vector.extract %101[0, 0, 0] : f32 from vector<1x1x1xf32>
    %103 = vector.broadcast %102 : f32 to vector<1x1xf32>
    %cst_43 = arith.constant 1.562500e-02 : f32
    %104 = vector.broadcast %cst_43 : f32 to vector<1x1xf32>
    %105 = arith.mulf %103, %104 : vector<1x1xf32>
    %106 = tpu.concatenate %65, %71 in 0 : vector<8x64xf32>, vector<8x64xf32> -> vector<16x64xf32>
    %cst_44 = arith.constant dense<0.000000e+00> : vector<16x16xf32>
    %107 = tpu.matmul %106, %106, %cst_44 {dimension_numbers = #tpu.dot_dimension_numbers<[1], [1], [0], [0], [0, 0, 1, 0], [], []>} : vector<16x64xf32>, vector<16x64xf32>, vector<16x16xf32> -> vector<16x16xf32>
    %108 = arith.mulf %107, %107 : vector<16x16xf32>
    %109 = tpu.iota {dimensions = array<i32: 0>} : vector<16x16xi32>
    %110 = tpu.iota {dimensions = array<i32: 1>} : vector<16x16xi32>
    %c8_i32 = arith.constant 8 : i32
    %111 = vector.broadcast %c8_i32 : i32 to vector<16x16xi32>
    %112 = arith.cmpi slt, %109, %111 : vector<16x16xi32>
    %c8_i32_45 = arith.constant 8 : i32
    %113 = vector.broadcast %c8_i32_45 : i32 to vector<16x16xi32>
    %114 = arith.cmpi slt, %110, %113 : vector<16x16xi32>
    %115 = arith.andi %112, %114 : vector<16x16xi1>
    %c8_i32_46 = arith.constant 8 : i32
    %116 = vector.broadcast %c8_i32_46 : i32 to vector<16x16xi32>
    %117 = arith.cmpi sge, %109, %116 : vector<16x16xi32>
    %c8_i32_47 = arith.constant 8 : i32
    %118 = vector.broadcast %c8_i32_47 : i32 to vector<16x16xi32>
    %119 = arith.cmpi sge, %110, %118 : vector<16x16xi32>
    %120 = arith.andi %117, %119 : vector<16x16xi1>
    %cst_48 = arith.constant 0.000000e+00 : f32
    %121 = vector.broadcast %cst_48 : f32 to vector<16x16xf32>
    %122 = arith.select %115, %108, %121 : vector<16x16xi1>, vector<16x16xf32>
    %123 = vector.shape_cast %122 : vector<16x16xf32> to vector<1x16x16xf32>
    %cst_49 = arith.constant dense<0.000000e+00> : vector<1xf32>
    %124 = vector.multi_reduction <add>, %123, %cst_49 [1, 2] : vector<1x16x16xf32> to vector<1xf32>
    %125 = vector.shape_cast %124 : vector<1xf32> to vector<1x1x1xf32>
    %126 = vector.extract %125[0, 0, 0] : f32 from vector<1x1x1xf32>
    %127 = vector.broadcast %126 : f32 to vector<1x1xf32>
    %cst_50 = arith.constant 0.000000e+00 : f32
    %128 = vector.broadcast %cst_50 : f32 to vector<16x16xf32>
    %129 = arith.select %120, %108, %128 : vector<16x16xi1>, vector<16x16xf32>
    %130 = vector.shape_cast %129 : vector<16x16xf32> to vector<1x16x16xf32>
    %cst_51 = arith.constant dense<0.000000e+00> : vector<1xf32>
    %131 = vector.multi_reduction <add>, %130, %cst_51 [1, 2] : vector<1x16x16xf32> to vector<1xf32>
    %132 = vector.shape_cast %131 : vector<1xf32> to vector<1x1x1xf32>
    %133 = vector.extract %132[0, 0, 0] : f32 from vector<1x1x1xf32>
    %134 = vector.broadcast %133 : f32 to vector<1x1xf32>
    %135 = arith.mulf %74, %74 : vector<1x64xf32>
    %136 = vector.shape_cast %135 : vector<1x64xf32> to vector<1x1x64xf32>
    %cst_52 = arith.constant dense<0.000000e+00> : vector<1xf32>
    %137 = vector.multi_reduction <add>, %136, %cst_52 [1, 2] : vector<1x1x64xf32> to vector<1xf32>
    %138 = vector.shape_cast %137 : vector<1xf32> to vector<1x1x1xf32>
    %139 = vector.extract %138[0, 0, 0] : f32 from vector<1x1x1xf32>
    %140 = vector.broadcast %139 : f32 to vector<1x1xf32>
    %141 = arith.subf %127, %140 : vector<1x1xf32>
    %cst_53 = arith.constant 3.18877544E-4 : f32
    %142 = vector.broadcast %cst_53 : f32 to vector<1x1xf32>
    %143 = arith.mulf %141, %142 : vector<1x1xf32>
    %144 = arith.mulf %77, %77 : vector<1x64xf32>
    %145 = vector.shape_cast %144 : vector<1x64xf32> to vector<1x1x64xf32>
    %cst_54 = arith.constant dense<0.000000e+00> : vector<1xf32>
    %146 = vector.multi_reduction <add>, %145, %cst_54 [1, 2] : vector<1x1x64xf32> to vector<1xf32>
    %147 = vector.shape_cast %146 : vector<1xf32> to vector<1x1x1xf32>
    %148 = vector.extract %147[0, 0, 0] : f32 from vector<1x1x1xf32>
    %149 = vector.broadcast %148 : f32 to vector<1x1xf32>
    %150 = arith.subf %134, %149 : vector<1x1xf32>
    %cst_55 = arith.constant 3.18877544E-4 : f32
    %151 = vector.broadcast %cst_55 : f32 to vector<1x1xf32>
    %152 = arith.mulf %150, %151 : vector<1x1xf32>
    %153 = arith.subf %58, %59 : vector<8x64xf32>
    %154 = arith.mulf %153, %153 : vector<8x64xf32>
    %155 = vector.shape_cast %154 : vector<8x64xf32> to vector<1x8x64xf32>
    %cst_56 = arith.constant dense<0.000000e+00> : vector<1xf32>
    %156 = vector.multi_reduction <add>, %155, %cst_56 [1, 2] : vector<1x8x64xf32> to vector<1xf32>
    %157 = vector.shape_cast %156 : vector<1xf32> to vector<1x1x1xf32>
    %158 = vector.extract %157[0, 0, 0] : f32 from vector<1x1x1xf32>
    %159 = vector.broadcast %158 : f32 to vector<1x1xf32>
    %cst_57 = arith.constant 0.001953125 : f32
    %160 = vector.broadcast %cst_57 : f32 to vector<1x1xf32>
    %161 = arith.mulf %159, %160 : vector<1x1xf32>
    %162 = arith.addf %94, %105 : vector<1x1xf32>
    %cst_58 = arith.constant 5.000000e-01 : f32
    %163 = vector.broadcast %cst_58 : f32 to vector<1x1xf32>
    %164 = arith.mulf %163, %162 : vector<1x1xf32>
    %cst_59 = arith.constant 1.000000e+00 : f32
    %165 = vector.broadcast %cst_59 : f32 to vector<1x1xf32>
    %166 = arith.mulf %165, %161 : vector<1x1xf32>
    %167 = arith.addf %164, %166 : vector<1x1xf32>
    %168 = arith.addf %143, %152 : vector<1x1xf32>
    %cst_60 = arith.constant 5.000000e-06 : f32
    %169 = vector.broadcast %cst_60 : f32 to vector<1x1xf32>
    %170 = arith.mulf %169, %168 : vector<1x1xf32>
    %171 = arith.addf %167, %170 : vector<1x1xf32>
    %cst_61 = arith.constant 1.000000e+00 : f32
    %172 = vector.broadcast %cst_61 : f32 to vector<1x1xf32>
    %173 = arith.mulf %172, %40 : vector<1x1xf32>
    %cst_62 = arith.constant 1.000000e+00 : f32
    %174 = vector.broadcast %cst_62 : f32 to vector<1x1xf32>
    %175 = arith.mulf %174, %171 : vector<1x1xf32>
    %176 = arith.addf %173, %175 : vector<1x1xf32>
    %177 = tpu.iota {dimensions = array<i32: 1>} : vector<1x128xi32>
    %c0_i32_63 = arith.constant 0 : i32
    %178 = vector.broadcast %c0_i32_63 : i32 to vector<1x128xi32>
    %179 = arith.cmpi eq, %177, %178 : vector<1x128xi32>
    %cst_64 = arith.constant 0.000000e+00 : f32
    %180 = vector.shape_cast %176 : vector<1x1xf32> to vector<1x1xf32>
    %181 = vector.broadcast %180 : vector<1x1xf32> to vector<1x128xf32>
    %182 = vector.broadcast %cst_64 : f32 to vector<1x128xf32>
    %183 = arith.select %179, %181, %182 : vector<1x128xi1>, vector<1x128xf32>
    %c1_i32_65 = arith.constant 1 : i32
    %184 = vector.broadcast %c1_i32_65 : i32 to vector<1x128xi32>
    %185 = arith.cmpi eq, %177, %184 : vector<1x128xi32>
    %cst_66 = arith.constant 0.000000e+00 : f32
    %186 = vector.shape_cast %40 : vector<1x1xf32> to vector<1x1xf32>
    %187 = vector.broadcast %186 : vector<1x1xf32> to vector<1x128xf32>
    %188 = vector.broadcast %cst_66 : f32 to vector<1x128xf32>
    %189 = arith.select %185, %187, %188 : vector<1x128xi1>, vector<1x128xf32>
    %190 = arith.addf %183, %189 : vector<1x128xf32>
    %c2_i32 = arith.constant 2 : i32
    %191 = vector.broadcast %c2_i32 : i32 to vector<1x128xi32>
    %192 = arith.cmpi eq, %177, %191 : vector<1x128xi32>
    %cst_67 = arith.constant 0.000000e+00 : f32
    %193 = vector.shape_cast %171 : vector<1x1xf32> to vector<1x1xf32>
    %194 = vector.broadcast %193 : vector<1x1xf32> to vector<1x128xf32>
    %195 = vector.broadcast %cst_67 : f32 to vector<1x128xf32>
    %196 = arith.select %192, %194, %195 : vector<1x128xi1>, vector<1x128xf32>
    %197 = arith.addf %190, %196 : vector<1x128xf32>
    %c0_68 = arith.constant 0 : index
    %c0_69 = arith.constant 0 : index
    %198 = vector.load %arg7[%c0_68, %c0_69] : memref<1x128xf32, #tpu.memory_space<vmem>>, vector<1x128xf32>
    tpu.vector_store %arg7[%c0_68, %c0_69], %197 {strides = array<i32>} : memref<1x128xf32, #tpu.memory_space<vmem>>, vector<1x128xf32>,
    return
  }
}

</mosaic_0001>

<llo_original>
// kernel: tpu_custom_call.1
$region0: #{tpu_custom_call.1}
  #allocation0 [shape = 'u32[]', space=smem, size = 0x4, offset = 0x4, fixed_abs, tag = 'smem constant byte address 0x4 - core index']
  #allocation1 [shape = 'u32[144,128]{1,0:T(1,128)}', space=vmem, size = 0x12000, scoped, tag = 'internal scratch']
  #allocation2 [shape = 'f32[32,64]{1,0:T(8,128)}', space=vmem, size = 0x4000, scoped, tag = 'scratch operand']
  #allocation3 [shape = 'f32[64,64]{1,0:T(8,128)}', space=vmem, size = 0x8000, scoped, tag = 'scratch operand']
  #allocation4 [shape = 's32[2]{0}', space=sflag, size = 0x8, scoped, tag = 'scratch operand']
  #allocation12 [shape = 's32[]', space=sflag, size = 0x4, offset = 0, fixed_abs, tag = 'sflag constant byte address 0x0 - dummy sync flag']
  #allocation13 [shape = 's32[]', space=sflag, size = 0x4, offset = 0, fixed_abs, tag = 'sflag constant byte address 0x0 - dummy sync flag']
  #allocation14 [shape = 'u32[]', space=smem, size = 0x4, offset = 0x44, fixed_abs, tag = 'smem constant byte address 0x44 - assertion arg 0']
  #allocation15 [shape = 'u32[]', space=smem, size = 0x4, offset = 0x48, fixed_abs, tag = 'smem constant byte address 0x48 - assertion arg 1']
  #allocation16 [shape = 's32[]', space=sflag, size = 0x4, offset = 0, fixed_abs, tag = 'sflag constant byte address 0x0 - dummy sync flag']
  #allocation17 [shape = 's32[]', space=sflag, size = 0x4, offset = 0, fixed_abs, tag = 'sflag constant byte address 0x0 - dummy sync flag']
  %s0 = inlined_call_operand.hbm [shape: f32[8,32], index: 0, kind: input, shape index: {}]
  %s1 = inlined_call_operand.hbm [shape: f32[8,32], index: 1, kind: input, shape index: {}]
  %s2 = inlined_call_operand.hbm [shape: f32[8,32], index: 2, kind: input, shape index: {}]
  %s3 = inlined_call_operand.vmem [shape: f32[1,64], index: 3, kind: input, shape index: {}]
  %s4 = inlined_call_operand.vmem [shape: f32[1,64], index: 4, kind: input, shape index: {}]
  %s5 = inlined_call_operand.hbm [shape: f32[32,64], index: 5, kind: input, shape index: {}]
  %s6 = inlined_call_operand.hbm [shape: f32[64,64], index: 6, kind: input, shape index: {}]
  %s7 = inlined_call_operand.hbm [shape: f32[1,128], index: 7, kind: output, shape index: {}]
  %s8 = sld [smem:[#allocation0]]
  $region50: #{tpu_custom_call.1} parent=0
    _
  %s10 = ssub.s32 1, %s8
  %s11 = scalar_select 0, %s10, %s8
  $region1: #{tpu_custom_call.1} parent=0
    #allocation5 [shape = 'u8[4096]{0}', space=vmem, size = 0x1000, scoped, tag = 'input window, operand 0, single buffered']
    #allocation6 [shape = 's32[1]{0}', space=sflag, size = 0x4, scoped, tag = 'scoped memory for tpu_custom_call.1']
    #allocation7 [shape = 's32[1]{0}', space=sflag, size = 0x4, scoped, tag = 'scoped memory for tpu_custom_call.1']
    #allocation8 [shape = 'u8[4096]{0}', space=vmem, size = 0x1000, scoped, tag = 'input window, operand 1, single buffered']
    #allocation9 [shape = 's32[1]{0}', space=sflag, size = 0x4, scoped, tag = 'scoped memory for tpu_custom_call.1']
    #allocation10 [shape = 'u8[4096]{0}', space=vmem, size = 0x1000, scoped, tag = 'input window, operand 2, single buffered']
    #allocation11 [shape = 'u8[512]{0}', space=vmem, size = 0x400, scoped, tag = 'output window, operand 0, single buffered']
    %12 = vsyncpa [#allocation6], 0
    %13 = vsyncpa [#allocation9], 0
    %14 = vsyncpa [#allocation7], 0
    // Predicated region
    $region2: #{tpu_custom_call.1} parent=1 // pred_check
      _
    $region3: #{tpu_custom_call.1} parent=1 // pred_check_branch
      %16 = sbr.rel (0) target = $region5
    $region4: #{tpu_custom_call.1} parent=1 // pred_region
      %s18 = ssub.s32 128, 128
      %19 = vsyncadd [#allocation6], %s18
      %s21 = sshll.u32 [#allocation5], 4
      %s22 = int_to_ptr.vmem [resolvable:$true] %s21
      %24 = dma.hbm_to_vmem [thread:$0]  %s0, 128, %s22, [#allocation6]
    $region5: #{tpu_custom_call.1} parent=1 // pred_fallthru
      _
    // Predicated region
    $region6: #{tpu_custom_call.1} parent=1 // pred_check
      _
    $region7: #{tpu_custom_call.1} parent=1 // pred_check_branch
      %26 = sbr.rel (0) target = $region9
    $region8: #{tpu_custom_call.1} parent=1 // pred_region
      %s28 = ssub.s32 128, 128
      %29 = vsyncadd [#allocation9], %s28
      %s31 = sshll.u32 [#allocation8], 4
      %s32 = int_to_ptr.vmem [resolvable:$true] %s31
      %34 = dma.hbm_to_vmem [thread:$0]  %s1, 128, %s32, [#allocation9]
    $region9: #{tpu_custom_call.1} parent=1 // pred_fallthru
      _
    // Predicated region
    $region10: #{tpu_custom_call.1} parent=1 // pred_check
      _
    $region11: #{tpu_custom_call.1} parent=1 // pred_check_branch
      %36 = sbr.rel (0) target = $region13
    $region12: #{tpu_custom_call.1} parent=1 // pred_region
      %s38 = ssub.s32 128, 128
      %39 = vsyncadd [#allocation9], %s38
      %s41 = sshll.u32 [#allocation10], 4
      %s42 = int_to_ptr.vmem [resolvable:$true] %s41
      %44 = dma.hbm_to_vmem [thread:$0]  %s2, 128, %s42, [#allocation9]
    $region13: #{tpu_custom_call.1} parent=1 // pred_fallthru
      _
    // Predicated region
    $region14: #{tpu_custom_call.1} parent=1 // pred_check
      _
    $region15: #{tpu_custom_call.1} parent=1 // pred_check_branch
      %46 = sbr.rel (0) target = $region17
    $region16: #{tpu_custom_call.1} parent=1 // pred_region
      _
    $region17: #{tpu_custom_call.1} parent=1 // pred_fallthru
      _
    // Predicated region
    $region18: #{tpu_custom_call.1} parent=1 // pred_check
      _
    $region19: #{tpu_custom_call.1} parent=1 // pred_check_branch
      %48 = sbr.rel (0) target = $region21
    $region20: #{tpu_custom_call.1} parent=1 // pred_region
      _
    $region21: #{tpu_custom_call.1} parent=1 // pred_fallthru
      _
    // Predicated region
    $region22: #{tpu_custom_call.1} parent=1 // pred_check
      _
    $region23: #{tpu_custom_call.1} parent=1 // pred_check_branch
      %50 = sbr.rel (0) target = $region25
    $region24: #{tpu_custom_call.1} parent=1 // pred_region
      %51 = dma.done [#allocation6], 128
    $region25: #{tpu_custom_call.1} parent=1 // pred_fallthru
      _
    // Predicated region
    $region26: #{tpu_custom_call.1} parent=1 // pred_check
      _
    $region27: #{tpu_custom_call.1} parent=1 // pred_check_branch
      %53 = sbr.rel (0) target = $region29
    $region28: #{tpu_custom_call.1} parent=1 // pred_region
      %54 = dma.done [#allocation9], 128
    $region29: #{tpu_custom_call.1} parent=1 // pred_fallthru
      _
    // Predicated region
    $region30: #{tpu_custom_call.1} parent=1 // pred_check
      _
    $region31: #{tpu_custom_call.1} parent=1 // pred_check_branch
      %56 = sbr.rel (0) target = $region33
    $region32: #{tpu_custom_call.1} parent=1 // pred_region
      %57 = dma.done [#allocation9], 128
    $region33: #{tpu_custom_call.1} parent=1 // pred_fallthru
      _
    // Predicated region
    $region34: #{tpu_custom_call.1} parent=1 // pred_check
      _
    $region35: #{tpu_custom_call.1} parent=1 // pred_check_branch
      %59 = sbr.rel target = $region37
    $region36: #{tpu_custom_call.1} parent=1 // pred_region
      %60 = sst [smem:[#allocation14]] [#allocation13]
      %61 = sst [smem:[#allocation15]] [#allocation12]
    $region37: #{tpu_custom_call.1} parent=1 // pred_fallthru
      _
    %63 = shalt.err (0)
    %s65 = sshll.u32 [#allocation2], 4
    %s66 = int_to_ptr.vmem [resolvable:$true] %s65
    %68 = dma.hbm_to_vmem [thread:$0]  %s5, 512, %s66, [#allocation4]
    %s69 = scalar_lea.sflag [#allocation4], 1
    // Predicated region
    $region38: #{tpu_custom_call.1} parent=1 // pred_check
      _
    $region39: #{tpu_custom_call.1} parent=1 // pred_check_branch
      %71 = sbr.rel target = $region41
    $region40: #{tpu_custom_call.1} parent=1 // pred_region
      %72 = sst [smem:[#allocation14]] [#allocation17]
      %73 = sst [smem:[#allocation15]] [#allocation16]
    $region41: #{tpu_custom_call.1} parent=1 // pred_fallthru
      _
    %75 = shalt.err (0)
    %s77 = sshll.u32 [#allocation3], 4
    %s78 = int_to_ptr.vmem [resolvable:$true] %s77
    %80 = dma.hbm_to_vmem [thread:$0]  %s6, 1024, %s78, %s69
    %v81 = vld [vmem:[#allocation5] sm:$0xff]
    %v82 = vld [vmem:[#allocation8] sm:$0xff]
    %v83 = vld [vmem:[#allocation10] sm:$0xff]
    %v84 = vmul.f32 %v81, %v81
    %v85 = vmul.f32 %v82, %v82
    %v86 = vmul.f32 %v83, %v83
    %vm87 = vcmask 261120
    %v88 = vsel %vm87, %v84, 0.0
    %89 = vadd.xlane.f32.xlu0 %v88
    %v90 = vpop.xlane.xlu0 %89
    %v91 = vsel %vm87, %v85, 0.0
    %92 = vadd.xlane.f32.xlu0 %v91
    %v93 = vpop.xlane.xlu0 %92
    %v94 = vsel %vm87, %v86, 0.0
    %95 = vadd.xlane.f32.xlu0 %v94
    %v96 = vpop.xlane.xlu0 %95
    %v97 = vmax.f32 %v90, 1e-16
    %v98 = vmax.f32 %v93, 1e-16
    %v99 = vmax.f32 %v96, 1e-16
    %v100 = vrsqrt.pop %v97
    %v101 = vrsqrt.pop %v98
    %v102 = vrsqrt.pop %v99
    %v103 = vmul.f32 %v81, %v100
    %v104 = vmul.f32 %v82, %v101
    %v105 = vmul.f32 %v83, %v102
    %v106 = vmul.f32 %v103, %v104
    %v107 = vsel %vm87, %v106, 0.0
    %108 = vadd.xlane.f32.xlu0 %v107
    %v109 = vpop.xlane.xlu0 %108
    %v110 = vsub.f32 1.0, %v109
    %v112 = vsel %vm87, %v103, 0
    %v115 = vsel %vm87, %v105, 0
    %117 = vmatprep.subr.mxu0 0.0
    %118 = vmatpush1.xpose.msra.mxu0 0.0
    %119 = vmatprep.subr.mxu0 0.0
    %120 = vmatpush1.xpose.msra.mxu0 0.0
    %121 = vmatprep.subr.mxu0 0.0
    %122 = vmatpush1.xpose.msra.mxu0 0.0
    %123 = vmatprep.subr.mxu0 0.0
    %124 = vmatpush1.xpose.msra.mxu0 0.0
    %125 = vmatprep.subr.mxu0 0.0
    %126 = vmatpush1.xpose.msra.mxu0 0.0
    %127 = vmatprep.subr.mxu0 0.0
    %128 = vmatpush1.xpose.msra.mxu0 0.0
    %129 = vmatprep.subr.mxu0 0.0
    %130 = vmatpush1.xpose.msra.mxu0 0.0
    %131 = vmatprep.subr.mxu0 0.0
    %132 = vmatpush1.xpose.msra.mxu0 0.0
    %133 = vmatprep.subr.mxu0 0.0
    %134 = vmatpush1.xpose.msra.mxu0 0.0
    %135 = vmatprep.subr.mxu0 0.0
    %136 = vmatpush1.xpose.msra.mxu0 0.0
    %137 = vmatprep.subr.mxu0 0.0
    %138 = vmatpush1.xpose.msra.mxu0 0.0
    %139 = vmatprep.subr.mxu0 0.0
    %140 = vmatpush1.xpose.msra.mxu0 0.0
    %141 = vmatprep.subr.mxu0 0.0
    %142 = vmatpush1.xpose.msra.mxu0 0.0
    %143 = vmatprep.subr.mxu0 0.0
    %144 = vmatpush1.xpose.msra.mxu0 0.0
    %145 = vmatprep.subr.mxu0 0.0
    %146 = vmatpush1.xpose.msra.mxu0 0.0
    %147 = vmatprep.subr.mxu0 0.0
    %148 = vmatpush1.xpose.msra.mxu0 %v115
    %149 = vmatprep.subr.mxu0 0.0
    %150 = vmatpush2.xpose.msra.mxu0 0.0
    %151 = vmatprep.subr.mxu0 0.0
    %152 = vmatpush2.xpose.msra.mxu0 0.0
    %153 = vmatprep.subr.mxu0 0.0
    %154 = vmatpush2.xpose.msra.mxu0 0.0
    %155 = vmatprep.subr.mxu0 0.0
    %156 = vmatpush2.xpose.msra.mxu0 0.0
    %157 = vmatprep.subr.mxu0 0.0
    %158 = vmatpush2.xpose.msra.mxu0 0.0
    %159 = vmatprep.subr.mxu0 0.0
    %160 = vmatpush2.xpose.msra.mxu0 0.0
    %161 = vmatprep.subr.mxu0 0.0
    %162 = vmatpush2.xpose.msra.mxu0 0.0
    %163 = vmatprep.subr.mxu0 0.0
    %164 = vmatpush2.xpose.msra.mxu0 0.0
    %165 = vmatprep.subr.mxu0 0.0
    %166 = vmatpush2.xpose.msra.mxu0 0.0
    %167 = vmatprep.subr.mxu0 0.0
    %168 = vmatpush2.xpose.msra.mxu0 0.0
    %169 = vmatprep.subr.mxu0 0.0
    %170 = vmatpush2.xpose.msra.mxu0 0.0
    %171 = vmatprep.subr.mxu0 0.0
    %172 = vmatpush2.xpose.msra.mxu0 0.0
    %173 = vmatprep.subr.mxu0 0.0
    %174 = vmatpush2.xpose.msra.mxu0 0.0
    %175 = vmatprep.subr.mxu0 0.0
    %176 = vmatpush2.xpose.msra.mxu0 0.0
    %177 = vmatprep.subr.mxu0 0.0
    %178 = vmatpush2.xpose.msra.mxu0 0.0
    %179 = vmatprep.subr.mxu0 0.0
    %180 = vmatpush2.xpose.msra.mxu0 0.0
    %181 = vmatprep.mubr.f32.mxu0 0.0
    %182 = vmatmul.mubr.f32.gmra.mxu0 %v112
    %v183 = vpop.f32.mrf.mxu0
    %v184 = vadd.f32 0.0, %v183
    %v185 = vpop.f32.mrf.mxu0
    %186 = vdwg.mxu0
    %v187 = vsub.f32 1.0, %v184
    %vm188 = vcmask 64512
    %v189 = vsel %vm188, %v187, inf
    %190 = vmin.xlane.f32.xlu0 %v189
    %v191 = vpop.xlane.xlu0 %190
    %v192 = vsub.f32 %v110, %v191
    %v193 = vadd.f32 %v192, 1.0
    %v194 = vmax.f32 %v193, 0.0
    %vm195 = vcmask 7168
    %v196 = vsel %vm195, %v194, 0.0
    %197 = vadd.xlane.f32.xlu0 %v196
    %v198 = vpop.xlane.xlu0 %197
    %v199 = vrot.slane %v198, 4
    %v200 = vadd.f32 %v198, %v199
    %v201 = vrot.slane %v200, 2
    %v202 = vadd.f32 %v200, %v201
    %v203 = vrot.slane %v202, 1
    %v204 = vadd.f32 %v202, %v203
    %s205 = vtos %v204
    %v206 = vstv %s205
    %v207 = vmul.f32 %v206, 0.125
    %s208 = smul.u32 32, 1
    %s209 = sshll.u32 %s208, 4
    %210 = dma.done [#allocation4], %s209
    %s211 = smul.u32 64, 1
    %s212 = sshll.u32 %s211, 4
    %213 = dma.done %s69, %s212
    %v214 = vld [vmem:[#allocation2] sm:$0xff]
    %v215 = vld [vmem:[#allocation2 + $0x8] sm:$0xff]
    %v216 = vld [vmem:[#allocation2 + $0x10] sm:$0xff]
    %v217 = vld [vmem:[#allocation2 + $0x18] sm:$0xff]
    %v218 = vld [vmem:[%s3] sm:$0x1]
    %v220 = vlaneseq
    %v221 = vshrl.u32 %v220, 7
    %v222 = vsub.s32 0, %v221
    %v223 = vrot.slane %v218, %v222
    %v226 = vsel %vm87, %v81, 0
    %v229 = vsel %vm87, %v82, 0
    %231 = vmatprep.subr.mxu0 0.0
    %232 = vmatpush1.msra.mxu0 0.0
    %233 = vmatprep.subr.mxu0 0.0
    %234 = vmatpush1.msra.mxu0 0.0
    %235 = vmatprep.subr.mxu0 0.0
    %236 = vmatpush1.msra.mxu0 0.0
    %237 = vmatprep.subr.mxu0 0.0
    %238 = vmatpush1.msra.mxu0 0.0
    %239 = vmatprep.subr.mxu0 0.0
    %240 = vmatpush1.msra.mxu0 0.0
    %241 = vmatprep.subr.mxu0 0.0
    %242 = vmatpush1.msra.mxu0 0.0
    %243 = vmatprep.subr.mxu0 0.0
    %244 = vmatpush1.msra.mxu0 0.0
    %245 = vmatprep.subr.mxu0 0.0
    %246 = vmatpush1.msra.mxu0 0.0
    %247 = vmatprep.subr.mxu0 0.0
    %248 = vmatpush1.msra.mxu0 0.0
    %249 = vmatprep.subr.mxu0 0.0
    %250 = vmatpush1.msra.mxu0 0.0
    %251 = vmatprep.subr.mxu0 0.0
    %252 = vmatpush1.msra.mxu0 0.0
    %253 = vmatprep.subr.mxu0 0.0
    %254 = vmatpush1.msra.mxu0 0.0
    %255 = vmatprep.subr.mxu0 0.0
    %256 = vmatpush1.msra.mxu0 %v217
    %257 = vmatprep.subr.mxu0 0.0
    %258 = vmatpush1.msra.mxu0 %v216
    %259 = vmatprep.subr.mxu0 0.0
    %260 = vmatpush1.msra.mxu0 %v215
    %261 = vmatprep.subr.mxu0 0.0
    %262 = vmatpush1.msra.mxu0 %v214
    %263 = vmatprep.subr.mxu0 0.0
    %264 = vmatpush2.msra.mxu0 0.0
    %265 = vmatprep.subr.mxu0 0.0
    %266 = vmatpush2.msra.mxu0 0.0
    %267 = vmatprep.subr.mxu0 0.0
    %268 = vmatpush2.msra.mxu0 0.0
    %269 = vmatprep.subr.mxu0 0.0
    %270 = vmatpush2.msra.mxu0 0.0
    %271 = vmatprep.subr.mxu0 0.0
    %272 = vmatpush2.msra.mxu0 0.0
    %273 = vmatprep.subr.mxu0 0.0
    %274 = vmatpush2.msra.mxu0 0.0
    %275 = vmatprep.subr.mxu0 0.0
    %276 = vmatpush2.msra.mxu0 0.0
    %277 = vmatprep.subr.mxu0 0.0
    %278 = vmatpush2.msra.mxu0 0.0
    %279 = vmatprep.subr.mxu0 0.0
    %280 = vmatpush2.msra.mxu0 0.0
    %281 = vmatprep.subr.mxu0 0.0
    %282 = vmatpush2.msra.mxu0 0.0
    %283 = vmatprep.subr.mxu0 0.0
    %284 = vmatpush2.msra.mxu0 0.0
    %285 = vmatprep.subr.mxu0 0.0
    %286 = vmatpush2.msra.mxu0 0.0
    %287 = vmatprep.subr.mxu0 0.0
    %288 = vmatpush2.msra.mxu0 0.0
    %289 = vmatprep.subr.mxu0 0.0
    %290 = vmatpush2.msra.mxu0 0.0
    %291 = vmatprep.subr.mxu0 0.0
    %292 = vmatpush2.msra.mxu0 0.0
    %293 = vmatprep.subr.mxu0 0.0
    %294 = vmatpush2.msra.mxu0 0.0
    %295 = vmatprep.mubr.f32.mxu0 0.0
    %296 = vmatmul.mubr.f32.gmra.mxu0 %v226
    %v297 = vpop.f32.mrf.mxu0
    %v298 = vadd.f32 %v223, %v297
    %v299 = vpop.f32.mrf.mxu0
    %300 = vmatprep.mubr.f32.mxu0 0.0
    %301 = vmatmul.mubr.f32.gmra.mxu0 %v229
    %v302 = vpop.f32.mrf.mxu0
    %v303 = vadd.f32 %v223, %v302
    %v304 = vpop.f32.mrf.mxu0
    %305 = vdwg.mxu0
    %v306 = vmax.f32 %v298, 0.0
    %v307 = vmax.f32 %v303, 0.0
    %v308 = vld [vmem:[#allocation3] sm:$0xff]
    %v309 = vld [vmem:[#allocation3 + $0x8] sm:$0xff]
    %v310 = vld [vmem:[#allocation3 + $0x10] sm:$0xff]
    %v311 = vld [vmem:[#allocation3 + $0x18] sm:$0xff]
    %v312 = vld [vmem:[#allocation3 + $0x20] sm:$0xff]
    %v313 = vld [vmem:[#allocation3 + $0x28] sm:$0xff]
    %v314 = vld [vmem:[#allocation3 + $0x30] sm:$0xff]
    %v315 = vld [vmem:[#allocation3 + $0x38] sm:$0xff]
    %v316 = vld [vmem:[%s4] sm:$0x1]
    %v318 = vlaneseq
    %v319 = vshrl.u32 %v318, 7
    %v320 = vsub.s32 0, %v319
    %v321 = vrot.slane %v316, %v320
    %vm323 = vcmask 523264
    %v325 = vsel %vm323, %v306, 0
    %v328 = vsel %vm323, %v307, 0
    %330 = vmatprep.subr.mxu0 0.0
    %331 = vmatpush1.msra.mxu0 0.0
    %332 = vmatprep.subr.mxu0 0.0
    %333 = vmatpush1.msra.mxu0 0.0
    %334 = vmatprep.subr.mxu0 0.0
    %335 = vmatpush1.msra.mxu0 0.0
    %336 = vmatprep.subr.mxu0 0.0
    %337 = vmatpush1.msra.mxu0 0.0
    %338 = vmatprep.subr.mxu0 0.0
    %339 = vmatpush1.msra.mxu0 0.0
    %340 = vmatprep.subr.mxu0 0.0
    %341 = vmatpush1.msra.mxu0 0.0
    %342 = vmatprep.subr.mxu0 0.0
    %343 = vmatpush1.msra.mxu0 0.0
    %344 = vmatprep.subr.mxu0 0.0
    %345 = vmatpush1.msra.mxu0 0.0
    %346 = vmatprep.subr.mxu0 0.0
    %347 = vmatpush1.msra.mxu0 %v315
    %348 = vmatprep.subr.mxu0 0.0
    %349 = vmatpush1.msra.mxu0 %v314
    %350 = vmatprep.subr.mxu0 0.0
    %351 = vmatpush1.msra.mxu0 %v313
    %352 = vmatprep.subr.mxu0 0.0
    %353 = vmatpush1.msra.mxu0 %v312
    %354 = vmatprep.subr.mxu0 0.0
    %355 = vmatpush1.msra.mxu0 %v311
    %356 = vmatprep.subr.mxu0 0.0
    %357 = vmatpush1.msra.mxu0 %v310
    %358 = vmatprep.subr.mxu0 0.0
    %359 = vmatpush1.msra.mxu0 %v309
    %360 = vmatprep.subr.mxu0 0.0
    %361 = vmatpush1.msra.mxu0 %v308
    %362 = vmatprep.subr.mxu0 0.0
    %363 = vmatpush2.msra.mxu0 0.0
    %364 = vmatprep.subr.mxu0 0.0
    %365 = vmatpush2.msra.mxu0 0.0
    %366 = vmatprep.subr.mxu0 0.0
    %367 = vmatpush2.msra.mxu0 0.0
    %368 = vmatprep.subr.mxu0 0.0
    %369 = vmatpush2.msra.mxu0 0.0
    %370 = vmatprep.subr.mxu0 0.0
    %371 = vmatpush2.msra.mxu0 0.0
    %372 = vmatprep.subr.mxu0 0.0
    %373 = vmatpush2.msra.mxu0 0.0
    %374 = vmatprep.subr.mxu0 0.0
    %375 = vmatpush2.msra.mxu0 0.0
    %376 = vmatprep.subr.mxu0 0.0
    %377 = vmatpush2.msra.mxu0 0.0
    %378 = vmatprep.subr.mxu0 0.0
    %379 = vmatpush2.msra.mxu0 0.0
    %380 = vmatprep.subr.mxu0 0.0
    %381 = vmatpush2.msra.mxu0 0.0
    %382 = vmatprep.subr.mxu0 0.0
    %383 = vmatpush2.msra.mxu0 0.0
    %384 = vmatprep.subr.mxu0 0.0
    %385 = vmatpush2.msra.mxu0 0.0
    %386 = vmatprep.subr.mxu0 0.0
    %387 = vmatpush2.msra.mxu0 0.0
    %388 = vmatprep.subr.mxu0 0.0
    %389 = vmatpush2.msra.mxu0 0.0
    %390 = vmatprep.subr.mxu0 0.0
    %391 = vmatpush2.msra.mxu0 0.0
    %392 = vmatprep.subr.mxu0 0.0
    %393 = vmatpush2.msra.mxu0 0.0
    %394 = vmatprep.mubr.f32.mxu0 0.0
    %395 = vmatmul.mubr.f32.gmra.mxu0 %v325
    %v396 = vpop.f32.mrf.mxu0
    %v397 = vadd.f32 %v321, %v396
    %v398 = vpop.f32.mrf.mxu0
    %399 = vmatprep.mubr.f32.mxu0 0.0
    %400 = vmatmul.mubr.f32.gmra.mxu0 %v328
    %v401 = vpop.f32.mrf.mxu0
    %v402 = vadd.f32 %v321, %v401
    %v403 = vpop.f32.mrf.mxu0
    %404 = vdwg.mxu0
    %v405 = vsel %vm323, %v397, 0.0
    %v406 = vrot.slane %v405, 4
    %v407 = vadd.f32 %v405, %v406
    %v408 = vrot.slane %v407, 2
    %v409 = vadd.f32 %v407, %v408
    %v410 = vrot.slane %v409, 1
    %v411 = vadd.f32 %v409, %v410
    %v412 = vmul.f32 %v411, 0.125
    %v413 = vsub.f32 %v397, %v412
    %v414 = vsel %vm323, %v402, 0.0
    %v415 = vrot.slane %v414, 4
    %v416 = vadd.f32 %v414, %v415
    %v417 = vrot.slane %v416, 2
    %v418 = vadd.f32 %v416, %v417
    %v419 = vrot.slane %v418, 1
    %v420 = vadd.f32 %v418, %v419
    %v421 = vmul.f32 %v420, 0.125
    %v422 = vsub.f32 %v402, %v421
    %v423 = vmul.f32 %v413, %v413
    %v424 = vsel %vm323, %v423, 0.0
    %v425 = vrot.slane %v424, 4
    %v426 = vadd.f32 %v424, %v425
    %v427 = vrot.slane %v426, 2
    %v428 = vadd.f32 %v426, %v427
    %v429 = vrot.slane %v428, 1
    %v430 = vadd.f32 %v428, %v429
    %v431 = vmul.f32 %v422, %v422
    %v432 = vsel %vm323, %v431, 0.0
    %v433 = vrot.slane %v432, 4
    %v434 = vadd.f32 %v432, %v433
    %v435 = vrot.slane %v434, 2
    %v436 = vadd.f32 %v434, %v435
    %v437 = vrot.slane %v436, 1
    %v438 = vadd.f32 %v436, %v437
    %v439 = vrsqrt.pop %v430
    %v440 = vmul.f32 %v430, %v439
    %vm441 = vcmp.eq.f32.partialorder %v430, inf
    %v442 = vsel %vm441, %v430, %v440
    %vm443 = vcmp.eq.f32.partialorder %v430, 0.0
    %v444 = vand.u32 %v430, 2147483648
    %v445 = vsel %vm443, %v444, %v442
    %v446 = vmul.f32 %v445, 0.37796447
    %v447 = vrsqrt.pop %v438
    %v448 = vmul.f32 %v438, %v447
    %vm449 = vcmp.eq.f32.partialorder %v438, inf
    %v450 = vsel %vm449, %v438, %v448
    %vm451 = vcmp.eq.f32.partialorder %v438, 0.0
    %v452 = vand.u32 %v438, 2147483648
    %v453 = vsel %vm451, %v452, %v450
    %v454 = vmul.f32 %v453, 0.37796447
    %v455 = vsub.f32 1.0, %v446
    %v456 = vmax.f32 %v455, 0.0
    %vm457 = vcmask 516096
    %v458 = vsel %vm457, %v456, 0.0
    %459 = vadd.xlane.f32.xlu0 %v458
    %v460 = vpop.xlane.xlu0 %459
    %v461 = vrot.slane %v460, 4
    %v462 = vadd.f32 %v460, %v461
    %v463 = vrot.slane %v462, 2
    %v464 = vadd.f32 %v462, %v463
    %v465 = vrot.slane %v464, 1
    %v466 = vadd.f32 %v464, %v465
    %s467 = vtos %v466
    %v468 = vstv %s467
    %v469 = vmul.f32 %v468, 0.015625
    %v470 = vsub.f32 1.0, %v454
    %v471 = vmax.f32 %v470, 0.0
    %v472 = vsel %vm457, %v471, 0.0
    %473 = vadd.xlane.f32.xlu0 %v472
    %v474 = vpop.xlane.xlu0 %473
    %v475 = vrot.slane %v474, 4
    %v476 = vadd.f32 %v474, %v475
    %v477 = vrot.slane %v476, 2
    %v478 = vadd.f32 %v476, %v477
    %v479 = vrot.slane %v478, 1
    %v480 = vadd.f32 %v478, %v479
    %s481 = vtos %v480
    %v482 = vstv %s481
    %v483 = vmul.f32 %v482, 0.015625
    %v485 = vsel %vm323, %v413, 0
    %v488 = vsel %vm323, %v422, 0
    %490 = vmatprep.subr.mxu0 0.0
    %491 = vmatpush1.xpose.msra.mxu0 0.0
    %492 = vmatprep.subr.mxu0 0.0
    %493 = vmatpush1.xpose.msra.mxu0 0.0
    %494 = vmatprep.subr.mxu0 0.0
    %495 = vmatpush1.xpose.msra.mxu0 0.0
    %496 = vmatprep.subr.mxu0 0.0
    %497 = vmatpush1.xpose.msra.mxu0 0.0
    %498 = vmatprep.subr.mxu0 0.0
    %499 = vmatpush1.xpose.msra.mxu0 0.0
    %500 = vmatprep.subr.mxu0 0.0
    %501 = vmatpush1.xpose.msra.mxu0 0.0
    %502 = vmatprep.subr.mxu0 0.0
    %503 = vmatpush1.xpose.msra.mxu0 0.0
    %504 = vmatprep.subr.mxu0 0.0
    %505 = vmatpush1.xpose.msra.mxu0 0.0
    %506 = vmatprep.subr.mxu0 0.0
    %507 = vmatpush1.xpose.msra.mxu0 0.0
    %508 = vmatprep.subr.mxu0 0.0
    %509 = vmatpush1.xpose.msra.mxu0 0.0
    %510 = vmatprep.subr.mxu0 0.0
    %511 = vmatpush1.xpose.msra.mxu0 0.0
    %512 = vmatprep.subr.mxu0 0.0
    %513 = vmatpush1.xpose.msra.mxu0 0.0
    %514 = vmatprep.subr.mxu0 0.0
    %515 = vmatpush1.xpose.msra.mxu0 0.0
    %516 = vmatprep.subr.mxu0 0.0
    %517 = vmatpush1.xpose.msra.mxu0 0.0
    %518 = vmatprep.subr.mxu0 0.0
    %519 = vmatpush1.xpose.msra.mxu0 %v488
    %520 = vmatprep.subr.mxu0 0.0
    %521 = vmatpush1.xpose.msra.mxu0 %v485
    %522 = vmatprep.subr.mxu0 0.0
    %523 = vmatpush2.xpose.msra.mxu0 0.0
    %524 = vmatprep.subr.mxu0 0.0
    %525 = vmatpush2.xpose.msra.mxu0 0.0
    %526 = vmatprep.subr.mxu0 0.0
    %527 = vmatpush2.xpose.msra.mxu0 0.0
    %528 = vmatprep.subr.mxu0 0.0
    %529 = vmatpush2.xpose.msra.mxu0 0.0
    %530 = vmatprep.subr.mxu0 0.0
    %531 = vmatpush2.xpose.msra.mxu0 0.0
    %532 = vmatprep.subr.mxu0 0.0
    %533 = vmatpush2.xpose.msra.mxu0 0.0
    %534 = vmatprep.subr.mxu0 0.0
    %535 = vmatpush2.xpose.msra.mxu0 0.0
    %536 = vmatprep.subr.mxu0 0.0
    %537 = vmatpush2.xpose.msra.mxu0 0.0
    %538 = vmatprep.subr.mxu0 0.0
    %539 = vmatpush2.xpose.msra.mxu0 0.0
    %540 = vmatprep.subr.mxu0 0.0
    %541 = vmatpush2.xpose.msra.mxu0 0.0
    %542 = vmatprep.subr.mxu0 0.0
    %543 = vmatpush2.xpose.msra.mxu0 0.0
    %544 = vmatprep.subr.mxu0 0.0
    %545 = vmatpush2.xpose.msra.mxu0 0.0
    %546 = vmatprep.subr.mxu0 0.0
    %547 = vmatpush2.xpose.msra.mxu0 0.0
    %548 = vmatprep.subr.mxu0 0.0
    %549 = vmatpush2.xpose.msra.mxu0 0.0
    %550 = vmatprep.subr.mxu0 0.0
    %551 = vmatpush2.xpose.msra.mxu0 0.0
    %552 = vmatprep.subr.mxu0 0.0
    %553 = vmatpush2.xpose.msra.mxu0 0.0
    %554 = vmatprep.mubr.f32.mxu0 0.0
    %555 = vmatmul.mubr.f32.gmra.mxu0 %v485
    %v556 = vpop.f32.mrf.mxu0
    %v557 = vadd.f32 0.0, %v556
    %v558 = vpop.f32.mrf.mxu0
    %559 = vmatprep.mubr.f32.mxu0 0.0
    %560 = vmatmul.mubr.f32.gmra.mxu0 %v488
    %v561 = vpop.f32.mrf.mxu0
    %v562 = vadd.f32 0.0, %v561
    %v563 = vpop.f32.mrf.mxu0
    %564 = vdwg.mxu0
    %v565 = vmul.f32 %v557, %v557
    %v566 = vmul.f32 %v562, %v562
    %v567 = vlaneseq
    %v568 = vshrl.u32 %v567, 7
    %v569 = vadd.s32 %v568, 8
    %v570 = vlaneseq
    %v571 = vand.u32 %v570, 127
    %vm572 = vcmp.lt.s32.totalorder %v568, 8
    %vm573 = vcmp.lt.s32.totalorder %v569, 8
    %vm574 = vcmp.lt.s32.totalorder %v571, 8
    %vm575 = vmand %vm572, %vm574
    %vm576 = vmand %vm573, %vm574
    %vm577 = vcmp.ge.s32.totalorder %v568, 8
    %vm578 = vcmp.ge.s32.totalorder %v569, 8
    %vm579 = vcmp.ge.s32.totalorder %v571, 8
    %vm580 = vmand %vm577, %vm579
    %vm581 = vmand %vm578, %vm579
    %v582 = vsel %vm575, %v565, 0.0
    %v583 = vsel %vm576, %v566, 0.0
    %vm584 = vcmask 130048
    %v585 = vsel %vm584, %v582, 0.0
    %v586 = vsel %vm584, %v583, 0.0
    %v587 = vadd.f32 %v585, %v586
    %588 = vadd.xlane.f32.xlu0 %v587
    %v589 = vpop.xlane.xlu0 %588
    %v590 = vrot.slane %v589, 4
    %v591 = vadd.f32 %v589, %v590
    %v592 = vrot.slane %v591, 2
    %v593 = vadd.f32 %v591, %v592
    %v594 = vrot.slane %v593, 1
    %v595 = vadd.f32 %v593, %v594
    %s596 = vtos %v595
    %v597 = vstv %s596
    %v598 = vsel %vm580, %v565, 0.0
    %v599 = vsel %vm581, %v566, 0.0
    %v600 = vsel %vm584, %v598, 0.0
    %v601 = vsel %vm584, %v599, 0.0
    %v602 = vadd.f32 %v600, %v601
    %603 = vadd.xlane.f32.xlu0 %v602
    %v604 = vpop.xlane.xlu0 %603
    %v605 = vrot.slane %v604, 4
    %v606 = vadd.f32 %v604, %v605
    %v607 = vrot.slane %v606, 2
    %v608 = vadd.f32 %v606, %v607
    %v609 = vrot.slane %v608, 1
    %v610 = vadd.f32 %v608, %v609
    %s611 = vtos %v610
    %v612 = vstv %s611
    %v613 = vmul.f32 %v430, %v430
    %v614 = vsel %vm457, %v613, 0.0
    %615 = vadd.xlane.f32.xlu0 %v614
    %v616 = vpop.xlane.xlu0 %615
    %v617 = vrot.slane %v616, 4
    %v618 = vadd.f32 %v616, %v617
    %v619 = vrot.slane %v618, 2
    %v620 = vadd.f32 %v618, %v619
    %v621 = vrot.slane %v620, 1
    %v622 = vadd.f32 %v620, %v621
    %s623 = vtos %v622
    %v624 = vstv %s623
    %v625 = vsub.f32 %v597, %v624
    %v626 = vmul.f32 %v625, 0.00031887754
    %v627 = vmul.f32 %v438, %v438
    %v628 = vsel %vm457, %v627, 0.0
    %629 = vadd.xlane.f32.xlu0 %v628
    %v630 = vpop.xlane.xlu0 %629
    %v631 = vrot.slane %v630, 4
    %v632 = vadd.f32 %v630, %v631
    %v633 = vrot.slane %v632, 2
    %v634 = vadd.f32 %v632, %v633
    %v635 = vrot.slane %v634, 1
    %v636 = vadd.f32 %v634, %v635
    %s637 = vtos %v636
    %v638 = vstv %s637
    %v639 = vsub.f32 %v612, %v638
    %v640 = vmul.f32 %v639, 0.00031887754
    %v641 = vsub.f32 %v397, %v402
    %v642 = vmul.f32 %v641, %v641
    %v643 = vsel %vm323, %v642, 0.0
    %644 = vadd.xlane.f32.xlu0 %v643
    %v645 = vpop.xlane.xlu0 %644
    %v646 = vrot.slane %v645, 4
    %v647 = vadd.f32 %v645, %v646
    %v648 = vrot.slane %v647, 2
    %v649 = vadd.f32 %v647, %v648
    %v650 = vrot.slane %v649, 1
    %v651 = vadd.f32 %v649, %v650
    %s652 = vtos %v651
    %v653 = vstv %s652
    %v654 = vmul.f32 %v653, 0.001953125
    %v655 = vadd.f32 %v469, %v483
    %v656 = vmul.f32 %v655, 0.5
    %v657 = vadd.f32 %v656, %v654
    %v658 = vadd.f32 %v626, %v640
    %v659 = vmul.f32 %v658, 5e-06
    %v660 = vadd.f32 %v657, %v659
    %v661 = vadd.f32 %v207, %v660
    %vm662 = vcmp.eq.s32.totalorder %v571, 0
    %v663 = vsel %vm662, %v661, 0.0
    %vm664 = vcmp.eq.s32.totalorder %v571, 1
    %v665 = vsel %vm664, %v207, 0.0
    %v666 = vadd.f32 %v663, %v665
    %vm667 = vcmp.eq.s32.totalorder %v571, 2
    %v668 = vsel %vm667, %v660, 0.0
    %v669 = vadd.f32 %v666, %v668
    %670 = vst [vmem:[#allocation11] sm:$0x1] %v669
    // Predicated region
    $region42: #{tpu_custom_call.1} parent=1 // pred_check
      _
    $region43: #{tpu_custom_call.1} parent=1 // pred_check_branch
      %672 = sbr.rel (0) target = $region45
    $region44: #{tpu_custom_call.1} parent=1 // pred_region
      %s674 = ssub.s32 16, 16
      %675 = vsyncadd [#allocation7], %s674
      %s677 = sshll.u32 [#allocation11], 4
      %s678 = int_to_ptr.vmem [resolvable:$true] %s677
      %680 = dma.vmem_to_hbm [thread:$0]  %s678, 16, %s7, [#allocation7]
    $region45: #{tpu_custom_call.1} parent=1 // pred_fallthru
      _
    // Predicated region
    $region46: #{tpu_custom_call.1} parent=1 // pred_check
      _
    $region47: #{tpu_custom_call.1} parent=1 // pred_check_branch
      %682 = sbr.rel (0) target = $region49
    $region48: #{tpu_custom_call.1} parent=1 // pred_region
      %683 = dma.done [#allocation7], 16
    $region49: #{tpu_custom_call.1} parent=1 // pred_fallthru
      _
    %684 = vsyncpa [#allocation6], 1
    %685 = vsyncpa [#allocation9], 1
    %686 = vsyncpa [#allocation7], 1
  %687 = vsyncmov [#allocation4]
  %s688 = vpop.sfrf %687
  %p689 = scmp.eq.s32.totalorder %s688, 0
  %p690 = pneg %p689
  %692 = shalt.err (%p690)
  %s693 = scalar_lea.sflag [#allocation4], 1
  %694 = vsyncmov %s693
  %s695 = vpop.sfrf %694
  %p696 = scmp.eq.s32.totalorder %s695, 0
  %p697 = pneg %p696
  %699 = shalt.err (%p697)

</llo_original>
